<compile_context>
chip_gen: v7x
topology: tpu7x:2x2x1
jax: 0.10.0
libtpu: 0.0.40
codegen_flags: <defaults>
</compile_context>

<pallas_src>
import jax
import jax.numpy as jnp
from jax.experimental import pallas as pl
from jax.experimental.pallas import tpu as pltpu


def _round_up(a: int, b: int) -> int:
    return ((a + b - 1) // b) * b


def _vmem_capacity_bytes() -> int:
    try:
        return int(pltpu.get_tpu_info().vmem_capacity_bytes)
    except Exception:
        return 64 << 20  # conservative fallback: assume v7x-sized VMEM


def _vmem_budget_bytes() -> int:
    # Tile-footprint budget: leave headroom for Mosaic internal scratch and
    # surrounding XLA fusions.  v7x (64 MiB) -> 48 MiB; v5e/v6e (128 MiB) -> 96 MiB.
    cap = _vmem_capacity_bytes()
    return min(cap * 3 // 4, 96 << 20)


# ----------------------------------------------------------------------------- kernels
def _lm_head_bias_kernel(x_ref, w_ref, b_ref, o_ref):
    """One (vocab-tile j, token-tile i) step of logits = x @ W^T + b."""
    # x: (tm, H), w: (tn, H) -> contract hidden dim of both operands directly
    # (MXU transposed-RHS path, no materialized transpose); f32 accumulation.
    acc = jax.lax.dot_general(
        x_ref[...],
        w_ref[...],
        dimension_numbers=(((1,), (1,)), ((), ())),
        preferred_element_type=jnp.float32,
    )
    o_ref[...] = (acc + b_ref[...]).astype(o_ref.dtype)


def _lm_head_kernel(x_ref, w_ref, o_ref):
    """Bias-free variant: no bias HBM stream, no per-tile broadcast add."""
    acc = jax.lax.dot_general(
        x_ref[...],
        w_ref[...],
        dimension_numbers=(((1,), (1,)), ((), ())),
        preferred_element_type=jnp.float32,
    )
    o_ref[...] = acc.astype(o_ref.dtype)


# --------------------------------------------------------------------- one-time weight prep
def prepare_lm_head_params(weight, bias=None, *, weight_dtype=None,
                           tn=1024, tm_hint=256, out_itemsize_hint=4):
    """One-time LM-head parameter preparation (do this at weight-load time).

    weight: [V, H], bias: [V] or None.
    weight_dtype=jnp.bfloat16 enables narrow weight streaming (halves HBM traffic;
    f32 accumulation is kept on the MXU).  Returns a dict consumed by lm_head_logits.
    """
    V, H = weight.shape
    if weight_dtype is not None and weight.dtype != jnp.dtype(weight_dtype):
        weight = weight.astype(weight_dtype)

    # Pad hidden dim to a lane multiple; zero columns contribute nothing.
    H_pad = _round_up(max(H, 128), 128)
    if H_pad != H:
        weight = jnp.pad(weight, ((0, 0), (0, H_pad - H)))

    # Choose the vocab tile once, under the generation-aware VMEM budget, counting
    # weight + x + output double-buffers and the bias tile.
    w_sz = jnp.dtype(weight.dtype).itemsize
    x_sz = w_sz  # activations are cast to the streaming dtype at call time
    budget = _vmem_budget_bytes()
    tn = _round_up(max(128, min(int(tn), _round_up(V, 128))), 128)

    def _footprint(tn_):
        return (2 * tn_ * H_pad * w_sz            # weight (double-buffered)
                + 2 * tm_hint * H_pad * x_sz      # x (double-buffered)
                + 2 * tm_hint * tn_ * out_itemsize_hint  # output (double-buffered)
                + 2 * tn_ * 4)                    # bias

    while tn > 128 and _footprint(tn) > budget:
        tn -= 128

    # Pad vocab once to a multiple of tn so every call uses the same padded weight.
    V_pad = _round_up(V, tn)
    if V_pad != V:
        weight = jnp.pad(weight, ((0, V_pad - V), (0, 0)))

    bias2d = None
    if bias is not None:
        b = bias.astype(jnp.float32)
        if V_pad != V:
            b = jnp.pad(b, ((0, V_pad - V),))
        bias2d = b.reshape(1, V_pad)

    return dict(weight=weight, bias2d=bias2d, V=V, H=H, V_pad=V_pad, H_pad=H_pad, tn=tn)


# ------------------------------------------------------------------------------- forward
def lm_head_logits(x, params, *, tm=256, out_dtype=None):
    """logits = x @ weight.T (+ bias).  x: [M, H]; params from prepare_lm_head_params."""
    V, H = params["V"], params["H"]
    V_pad, H_pad, tn = params["V_pad"], params["H_pad"], params["tn"]
    weight, bias2d = params["weight"], params["bias2d"]

    M, Hx = x.shape
    assert Hx == H, (x.shape, (V, H))
    out_dtype = out_dtype if out_dtype is not None else x.dtype

    # Cast activations to the streaming dtype (explicit numerics choice, see header).
    if x.dtype != weight.dtype:
        x = x.astype(weight.dtype)
    if H_pad != H:
        x = jnp.pad(x, ((0, 0), (0, H_pad - H)))

    # Token tile: minimal multiple of 8 for the chosen number of token tiles.
    n_m = max(1, -(-M // tm))
    tm_eff = _round_up(-(-M // n_m), 8)

    # Shrink tm if the full tile footprint would blow the per-generation budget
    # (only relevant for very large H / f32 streaming).
    budget = _vmem_budget_bytes()
    w_sz = jnp.dtype(weight.dtype).itemsize
    x_sz = jnp.dtype(x.dtype).itemsize
    o_sz = jnp.dtype(out_dtype).itemsize

    def _need(tm_):
        return (2 * tn * H_pad * w_sz + 2 * tm_ * H_pad * x_sz
                + 2 * tm_ * tn * o_sz + 2 * tn * 4)

    while tm_eff > 8 and _need(tm_eff) > budget:
        tm_eff = _round_up(max(tm_eff // 2, 8), 8)

    M_pad = _round_up(M, tm_eff)
    if M_pad != M:
        x = jnp.pad(x, ((0, M_pad - M), (0, 0)))

    vmem_need = _need(tm_eff)
    vmem_limit = int(min(max(vmem_need + (4 << 20), 24 << 20), budget))

    # Vocab axis OUTER, token axis INNER: the weight block index is constant across
    # the inner token sweep, so the full V*H weight is streamed from HBM exactly once.
    n_v = V_pad // tn
    n_m = M_pad // tm_eff
    grid = (n_v, n_m)

    cost = pl.CostEstimate(
        flops=2 * M_pad * V_pad * H_pad,
        transcendentals=0,
        bytes_accessed=(V_pad * H_pad * w_sz          # weight streamed once
                        + n_v * M_pad * H_pad * x_sz  # x re-streamed per vocab tile
                        + M_pad * V_pad * o_sz        # output writeback
                        + (V_pad * 4 if bias2d is not None else 0)),
    )

    x_spec = pl.BlockSpec((tm_eff, H_pad), lambda j, i: (i, 0))
    w_spec = pl.BlockSpec((tn, H_pad), lambda j, i: (j, 0))    # constant in i -> resident
    o_spec = pl.BlockSpec((tm_eff, tn), lambda j, i: (i, j))

    if bias2d is not None:
        kernel = _lm_head_bias_kernel
        in_specs = [x_spec, w_spec, pl.BlockSpec((1, tn), lambda j, i: (0, j))]
        operands = (x, weight, bias2d)
    else:
        kernel = _lm_head_kernel
        in_specs = [x_spec, w_spec]
        operands = (x, weight)

    out = pl.pallas_call(
        kernel,
        out_shape=jax.ShapeDtypeStruct((M_pad, V_pad), out_dtype),
        grid_spec=pltpu.PrefetchScalarGridSpec(
            num_scalar_prefetch=0,
            grid=grid,
            in_specs=in_specs,
            out_specs=o_spec,
        ),
        compiler_params=pltpu.CompilerParams(
            # vocab axis parallel -> v7x's two TensorCores split the weight stream;
            # token axis arbitrary -> weight stays resident within each core's sweep.
            dimension_semantics=("parallel", "arbitrary"),
            vmem_limit_bytes=vmem_limit,
        ),
        cost_estimate=cost,
    )(*operands)

    if M_pad != M or V_pad != V:
        out = out[:M, :V]
    return out


def parallel_lm_head_forward(hidden_states, params, cu_seqlens_q=None,
                             is_prefill=True, **kwargs):
    """Mirror of ParallelLMHead.forward for tp_size == 1.

    hidden_states: [total_tokens, hidden_dim]
    cu_seqlens_q:  [num_seqs + 1] cumulative sequence lengths (prefill only)
    returns:       [num_seqs, vocab_size] (prefill) or [total_tokens, vocab_size]
    """
    if is_prefill:
        last_indices = cu_seqlens_q[1:] - 1
        x = hidden_states[last_indices]
    else:
        x = hidden_states
    return lm_head_logits(x, params, **kwargs)


if __name__ == "__main__":
    # Small, deterministic shapes consistent with the module.
    vocab_size = 512       # num_embeddings (single partition, tp_size = 1)
    hidden_dim = 256       # embedding_dim
    total_tokens = 16      # flattened tokens across sequences
    num_seqs = 2

    key = jax.random.PRNGKey(0)
    kx, kw, kb = jax.random.split(key, 3)

    hidden_states = jax.random.normal(kx, (total_tokens, hidden_dim), dtype=jnp.float32)
    weight = jax.random.normal(kw, (vocab_size, hidden_dim), dtype=jnp.float32) * 0.02
    bias = jax.random.normal(kb, (vocab_size,), dtype=jnp.float32) * 0.01
    cu_seqlens_q = jnp.array([0, 8, 16], dtype=jnp.int32)   # two sequences of length 8

    last_idx = cu_seqlens_q[1:] - 1
    x_last = hidden_states[last_idx]

    # One-time weight preparation (hoisted out of the per-call path).
    params_f32 = prepare_lm_head_params(weight, bias)                      # exact numerics
    params_nobias = prepare_lm_head_params(weight, None)                   # bias-free variant
    params_bf16 = prepare_lm_head_params(weight, bias,
                                         weight_dtype=jnp.bfloat16)        # narrow streaming

    # --- prefill path (last token per sequence) ---
    logits = parallel_lm_head_forward(hidden_states, params_f32, cu_seqlens_q,
                                      is_prefill=True)
    logits = jax.block_until_ready(logits)
    ref = x_last @ weight.T + bias
    assert logits.shape == (num_seqs, vocab_size)
    assert jnp.allclose(logits, ref, atol=1e-4, rtol=1e-4)

    # --- decode path (all tokens) ---
    logits_dec = parallel_lm_head_forward(hidden_states, params_f32, cu_seqlens_q,
                                          is_prefill=False)
    logits_dec = jax.block_until_ready(logits_dec)
    ref_dec = hidden_states @ weight.T + bias
    assert logits_dec.shape == (total_tokens, vocab_size)
    assert jnp.allclose(logits_dec, ref_dec, atol=1e-4, rtol=1e-4)

    # --- bias=None path (no bias stream / add) ---
    logits_nb = parallel_lm_head_forward(hidden_states, params_nobias, cu_seqlens_q,
                                         is_prefill=True)
    logits_nb = jax.block_until_ready(logits_nb)
    ref_nb = x_last @ weight.T
    assert jnp.allclose(logits_nb, ref_nb, atol=1e-4, rtol=1e-4)

    # --- ragged vocab (not a multiple of 128) exercises the padding/slicing path ---
    v_odd = 500
    params_odd = prepare_lm_head_params(weight[:v_odd], bias[:v_odd])
    logits_odd = parallel_lm_head_forward(hidden_states, params_odd, cu_seqlens_q,
                                          is_prefill=True)
    logits_odd = jax.block_until_ready(logits_odd)
    ref_odd = x_last @ weight[:v_odd].T + bias[:v_odd]
    assert logits_odd.shape == (num_seqs, v_odd)
    assert jnp.allclose(logits_odd, ref_odd, atol=1e-4, rtol=1e-4)

    # --- bf16 weight-streaming path (memory-bound production default), loose tolerance ---
    logits_bf16 = parallel_lm_head_forward(hidden_states, params_bf16, cu_seqlens_q,
                                           is_prefill=True)
    logits_bf16 = jax.block_until_ready(logits_bf16)
    assert logits_bf16.shape == (num_seqs, vocab_size)
    assert jnp.allclose(logits_bf16, ref, atol=5e-2, rtol=5e-2)

    print("KERNEL_OK")
</pallas_src>

<mosaic_0001>
module attributes {stable_mosaic.version = 11 : i64} {
  func.func @_lm_head_bias_kernel(%arg0: i32, %arg1: i32, %arg2: memref<8x256xf32, #tpu.memory_space<vmem>>, %arg3: memref<512x256xf32, #tpu.memory_space<vmem>>, %arg4: memref<1x512xf32, #tpu.memory_space<vmem>>, %arg5: memref<8x512xf32, #tpu.memory_space<vmem>>) attributes {dimension_semantics = [#tpu.dimension_semantics<parallel>, #tpu.dimension_semantics<arbitrary>], iteration_bounds = array<i64: 1, 1>, scalar_prefetch = 0 : i64, scratch_operands = 0 : i64, tpu.core_type = #tpu.core_type<tc>, window_params = [{transform_indices = @transform_0, window_bounds = array<i64: 8, 256>}, {transform_indices = @transform_1, window_bounds = array<i64: 512, 256>}, {transform_indices = @transform_2, window_bounds = array<i64: 1, 512>}, {transform_indices = @transform_3, window_bounds = array<i64: 8, 512>}]} {
    %c0 = arith.constant 0 : index
    %c0_0 = arith.constant 0 : index
    %0 = vector.load %arg2[%c0, %c0_0] : memref<8x256xf32, #tpu.memory_space<vmem>>, vector<8x256xf32>
    %c0_1 = arith.constant 0 : index
    %c0_2 = arith.constant 0 : index
    %1 = vector.load %arg3[%c0_1, %c0_2] : memref<512x256xf32, #tpu.memory_space<vmem>>, vector<512x256xf32>
    %cst = arith.constant dense<0.000000e+00> : vector<8x512xf32>
    %2 = tpu.matmul %0, %1, %cst {dimension_numbers = #tpu.dot_dimension_numbers<[1], [1], [0], [0], [0, 0, 1, 0], [], []>} : vector<8x256xf32>, vector<512x256xf32>, vector<8x512xf32> -> vector<8x512xf32>
    %c0_3 = arith.constant 0 : index
    %c0_4 = arith.constant 0 : index
    %3 = vector.load %arg4[%c0_3, %c0_4] : memref<1x512xf32, #tpu.memory_space<vmem>>, vector<1x512xf32>
    %4 = vector.broadcast %3 : vector<1x512xf32> to vector<8x512xf32>
    %5 = arith.addf %2, %4 : vector<8x512xf32>
    %c0_5 = arith.constant 0 : index
    %c0_6 = arith.constant 0 : index
    %6 = vector.load %arg5[%c0_5, %c0_6] : memref<8x512xf32, #tpu.memory_space<vmem>>, vector<8x512xf32>
    tpu.vector_store %arg5[%c0_5, %c0_6], %5 {strides = array<i32>} : memref<8x512xf32, #tpu.memory_space<vmem>>, vector<8x512xf32>,
    return
  }
  func.func @transform_0(%arg0: i32, %arg1: i32) -> (i32, i32) {
    %c0_i32 = arith.constant 0 : i32
    %c0_i32_0 = arith.constant 0 : i32
    return %arg1, %c0_i32 : i32, i32
  }
  func.func @transform_1(%arg0: i32, %arg1: i32) -> (i32, i32) {
    %c0_i32 = arith.constant 0 : i32
    %c0_i32_0 = arith.constant 0 : i32
    return %arg0, %c0_i32 : i32, i32
  }
  func.func @transform_2(%arg0: i32, %arg1: i32) -> (i32, i32) {
    %c0_i32 = arith.constant 0 : i32
    %c0_i32_0 = arith.constant 0 : i32
    return %c0_i32, %arg0 : i32, i32
  }
  func.func @transform_3(%arg0: i32, %arg1: i32) -> (i32, i32) {
    %c0_i32 = arith.constant 0 : i32
    return %arg1, %arg0 : i32, i32
  }
}

</mosaic_0001>

<llo_original>
// kernel: tpu_custom_call.1
$region0: #{tpu_custom_call.1}
  #allocation0 [shape = 'u32[]', space=smem, size = 0x4, offset = 0x4, fixed_abs, tag = 'smem constant byte address 0x4 - core index']
  #allocation1 [shape = 'u32[144,128]{1,0:T(1,128)}', space=vmem, size = 0x12000, scoped, tag = 'internal scratch']
  %s0 = inlined_call_operand.hbm [shape: f32[8,256], index: 0, kind: input, shape index: {}]
  %s1 = inlined_call_operand.hbm [shape: f32[512,256], index: 1, kind: input, shape index: {}]
  %s2 = inlined_call_operand.vmem [shape: f32[1,512], index: 2, kind: input, shape index: {}]
  %s3 = inlined_call_operand.hbm [shape: f32[8,512], index: 3, kind: output, shape index: {}]
  %s4 = sld [smem:[#allocation0]]
  $region30: #{tpu_custom_call.1} parent=0
    _
  %s6 = ssub.s32 1, %s4
  %s7 = scalar_select 0, %s6, %s4
  $region1: #{tpu_custom_call.1} parent=0
    #allocation2 [shape = 'u8[8192]{0}', space=vmem, size = 0x2000, scoped, tag = 'input window, operand 0, single buffered']
    #allocation3 [shape = 's32[1]{0}', space=sflag, size = 0x4, scoped, tag = 'scoped memory for tpu_custom_call.1']
    #allocation4 [shape = 's32[1]{0}', space=sflag, size = 0x4, scoped, tag = 'scoped memory for tpu_custom_call.1']
    #allocation5 [shape = 'u8[524288]{0}', space=vmem, size = 0x80000, scoped, tag = 'input window, operand 1, single buffered']
    #allocation6 [shape = 's32[1]{0}', space=sflag, size = 0x4, scoped, tag = 'scoped memory for tpu_custom_call.1']
    #allocation7 [shape = 'u8[16384]{0}', space=vmem, size = 0x4000, scoped, tag = 'output window, operand 0, single buffered']
    %8 = vsyncpa [#allocation3], 0
    %9 = vsyncpa [#allocation6], 0
    %10 = vsyncpa [#allocation4], 0
    // Predicated region
    $region2: #{tpu_custom_call.1} parent=1 // pred_check
      _
    $region3: #{tpu_custom_call.1} parent=1 // pred_check_branch
      %12 = sbr.rel (0) target = $region5
    $region4: #{tpu_custom_call.1} parent=1 // pred_region
      %s14 = ssub.s32 256, 256
      %15 = vsyncadd [#allocation3], %s14
      %s17 = sshll.u32 [#allocation2], 4
      %s18 = int_to_ptr.vmem [resolvable:$true] %s17
      %20 = dma.hbm_to_vmem [thread:$0]  %s0, 256, %s18, [#allocation3]
    $region5: #{tpu_custom_call.1} parent=1 // pred_fallthru
      _
    // Predicated region
    $region6: #{tpu_custom_call.1} parent=1 // pred_check
      _
    $region7: #{tpu_custom_call.1} parent=1 // pred_check_branch
      %22 = sbr.rel (0) target = $region9
    $region8: #{tpu_custom_call.1} parent=1 // pred_region
      %s24 = ssub.s32 16384, 16384
      %25 = vsyncadd [#allocation6], %s24
      %s26 = sshll.u32 [#allocation5], 4
      %s27 = int_to_ptr.vmem [resolvable:$true] %s26
      %32 = dma.hbm_to_vmem [thread:$0]  %s1, 16384, %s27, [#allocation6], 256, 256, 16
    $region9: #{tpu_custom_call.1} parent=1 // pred_fallthru
      _
    // Predicated region
    $region10: #{tpu_custom_call.1} parent=1 // pred_check
      _
    $region11: #{tpu_custom_call.1} parent=1 // pred_check_branch
      %34 = sbr.rel (0) target = $region13
    $region12: #{tpu_custom_call.1} parent=1 // pred_region
      _
    $region13: #{tpu_custom_call.1} parent=1 // pred_fallthru
      _
    // Predicated region
    $region14: #{tpu_custom_call.1} parent=1 // pred_check
      _
    $region15: #{tpu_custom_call.1} parent=1 // pred_check_branch
      %36 = sbr.rel (0) target = $region17
    $region16: #{tpu_custom_call.1} parent=1 // pred_region
      %37 = dma.done [#allocation3], 256
    $region17: #{tpu_custom_call.1} parent=1 // pred_fallthru
      _
    // Predicated region
    $region18: #{tpu_custom_call.1} parent=1 // pred_check
      _
    $region19: #{tpu_custom_call.1} parent=1 // pred_check_branch
      %39 = sbr.rel (0) target = $region21
    $region20: #{tpu_custom_call.1} parent=1 // pred_region
      %40 = dma.done [#allocation6], 16384
    $region21: #{tpu_custom_call.1} parent=1 // pred_fallthru
      _
    %v41 = vld [vmem:[#allocation2] sm:$0xff]
    %v42 = vld [vmem:[#allocation2 + $0x8] sm:$0xff]
    %v43 = vld [vmem:[#allocation5] sm:$0xff]
    %v44 = vld [vmem:[#allocation5 + $0x8] sm:$0xff]
    %v45 = vld [vmem:[#allocation5 + $0x10] sm:$0xff]
    %v46 = vld [vmem:[#allocation5 + $0x18] sm:$0xff]
    %v47 = vld [vmem:[#allocation5 + $0x20] sm:$0xff]
    %v48 = vld [vmem:[#allocation5 + $0x28] sm:$0xff]
    %v49 = vld [vmem:[#allocation5 + $0x30] sm:$0xff]
    %v50 = vld [vmem:[#allocation5 + $0x38] sm:$0xff]
    %v51 = vld [vmem:[#allocation5 + $0x40] sm:$0xff]
    %v52 = vld [vmem:[#allocation5 + $0x48] sm:$0xff]
    %v53 = vld [vmem:[#allocation5 + $0x50] sm:$0xff]
    %v54 = vld [vmem:[#allocation5 + $0x58] sm:$0xff]
    %v55 = vld [vmem:[#allocation5 + $0x60] sm:$0xff]
    %v56 = vld [vmem:[#allocation5 + $0x68] sm:$0xff]
    %v57 = vld [vmem:[#allocation5 + $0x70] sm:$0xff]
    %v58 = vld [vmem:[#allocation5 + $0x78] sm:$0xff]
    %v59 = vld [vmem:[#allocation5 + $0x80] sm:$0xff]
    %v60 = vld [vmem:[#allocation5 + $0x88] sm:$0xff]
    %v61 = vld [vmem:[#allocation5 + $0x90] sm:$0xff]
    %v62 = vld [vmem:[#allocation5 + $0x98] sm:$0xff]
    %v63 = vld [vmem:[#allocation5 + $0xa0] sm:$0xff]
    %v64 = vld [vmem:[#allocation5 + $0xa8] sm:$0xff]
    %v65 = vld [vmem:[#allocation5 + $0xb0] sm:$0xff]
    %v66 = vld [vmem:[#allocation5 + $0xb8] sm:$0xff]
    %v67 = vld [vmem:[#allocation5 + $0xc0] sm:$0xff]
    %v68 = vld [vmem:[#allocation5 + $0xc8] sm:$0xff]
    %v69 = vld [vmem:[#allocation5 + $0xd0] sm:$0xff]
    %v70 = vld [vmem:[#allocation5 + $0xd8] sm:$0xff]
    %v71 = vld [vmem:[#allocation5 + $0xe0] sm:$0xff]
    %v72 = vld [vmem:[#allocation5 + $0xe8] sm:$0xff]
    %v73 = vld [vmem:[#allocation5 + $0xf0] sm:$0xff]
    %v74 = vld [vmem:[#allocation5 + $0xf8] sm:$0xff]
    %v75 = vld [vmem:[#allocation5 + $0x100] sm:$0xff]
    %v76 = vld [vmem:[#allocation5 + $0x108] sm:$0xff]
    %v77 = vld [vmem:[#allocation5 + $0x110] sm:$0xff]
    %v78 = vld [vmem:[#allocation5 + $0x118] sm:$0xff]
    %v79 = vld [vmem:[#allocation5 + $0x120] sm:$0xff]
    %v80 = vld [vmem:[#allocation5 + $0x128] sm:$0xff]
    %v81 = vld [vmem:[#allocation5 + $0x130] sm:$0xff]
    %v82 = vld [vmem:[#allocation5 + $0x138] sm:$0xff]
    %v83 = vld [vmem:[#allocation5 + $0x140] sm:$0xff]
    %v84 = vld [vmem:[#allocation5 + $0x148] sm:$0xff]
    %v85 = vld [vmem:[#allocation5 + $0x150] sm:$0xff]
    %v86 = vld [vmem:[#allocation5 + $0x158] sm:$0xff]
    %v87 = vld [vmem:[#allocation5 + $0x160] sm:$0xff]
    %v88 = vld [vmem:[#allocation5 + $0x168] sm:$0xff]
    %v89 = vld [vmem:[#allocation5 + $0x170] sm:$0xff]
    %v90 = vld [vmem:[#allocation5 + $0x178] sm:$0xff]
    %v91 = vld [vmem:[#allocation5 + $0x180] sm:$0xff]
    %v92 = vld [vmem:[#allocation5 + $0x188] sm:$0xff]
    %v93 = vld [vmem:[#allocation5 + $0x190] sm:$0xff]
    %v94 = vld [vmem:[#allocation5 + $0x198] sm:$0xff]
    %v95 = vld [vmem:[#allocation5 + $0x1a0] sm:$0xff]
    %v96 = vld [vmem:[#allocation5 + $0x1a8] sm:$0xff]
    %v97 = vld [vmem:[#allocation5 + $0x1b0] sm:$0xff]
    %v98 = vld [vmem:[#allocation5 + $0x1b8] sm:$0xff]
    %v99 = vld [vmem:[#allocation5 + $0x1c0] sm:$0xff]
    %v100 = vld [vmem:[#allocation5 + $0x1c8] sm:$0xff]
    %v101 = vld [vmem:[#allocation5 + $0x1d0] sm:$0xff]
    %v102 = vld [vmem:[#allocation5 + $0x1d8] sm:$0xff]
    %v103 = vld [vmem:[#allocation5 + $0x1e0] sm:$0xff]
    %v104 = vld [vmem:[#allocation5 + $0x1e8] sm:$0xff]
    %v105 = vld [vmem:[#allocation5 + $0x1f0] sm:$0xff]
    %v106 = vld [vmem:[#allocation5 + $0x1f8] sm:$0xff]
    %v107 = vld [vmem:[#allocation5 + $0x200] sm:$0xff]
    %v108 = vld [vmem:[#allocation5 + $0x208] sm:$0xff]
    %v109 = vld [vmem:[#allocation5 + $0x210] sm:$0xff]
    %v110 = vld [vmem:[#allocation5 + $0x218] sm:$0xff]
    %v111 = vld [vmem:[#allocation5 + $0x220] sm:$0xff]
    %v112 = vld [vmem:[#allocation5 + $0x228] sm:$0xff]
    %v113 = vld [vmem:[#allocation5 + $0x230] sm:$0xff]
    %v114 = vld [vmem:[#allocation5 + $0x238] sm:$0xff]
    %v115 = vld [vmem:[#allocation5 + $0x240] sm:$0xff]
    %v116 = vld [vmem:[#allocation5 + $0x248] sm:$0xff]
    %v117 = vld [vmem:[#allocation5 + $0x250] sm:$0xff]
    %v118 = vld [vmem:[#allocation5 + $0x258] sm:$0xff]
    %v119 = vld [vmem:[#allocation5 + $0x260] sm:$0xff]
    %v120 = vld [vmem:[#allocation5 + $0x268] sm:$0xff]
    %v121 = vld [vmem:[#allocation5 + $0x270] sm:$0xff]
    %v122 = vld [vmem:[#allocation5 + $0x278] sm:$0xff]
    %v123 = vld [vmem:[#allocation5 + $0x280] sm:$0xff]
    %v124 = vld [vmem:[#allocation5 + $0x288] sm:$0xff]
    %v125 = vld [vmem:[#allocation5 + $0x290] sm:$0xff]
    %v126 = vld [vmem:[#allocation5 + $0x298] sm:$0xff]
    %v127 = vld [vmem:[#allocation5 + $0x2a0] sm:$0xff]
    %v128 = vld [vmem:[#allocation5 + $0x2a8] sm:$0xff]
    %v129 = vld [vmem:[#allocation5 + $0x2b0] sm:$0xff]
    %v130 = vld [vmem:[#allocation5 + $0x2b8] sm:$0xff]
    %v131 = vld [vmem:[#allocation5 + $0x2c0] sm:$0xff]
    %v132 = vld [vmem:[#allocation5 + $0x2c8] sm:$0xff]
    %v133 = vld [vmem:[#allocation5 + $0x2d0] sm:$0xff]
    %v134 = vld [vmem:[#allocation5 + $0x2d8] sm:$0xff]
    %v135 = vld [vmem:[#allocation5 + $0x2e0] sm:$0xff]
    %v136 = vld [vmem:[#allocation5 + $0x2e8] sm:$0xff]
    %v137 = vld [vmem:[#allocation5 + $0x2f0] sm:$0xff]
    %v138 = vld [vmem:[#allocation5 + $0x2f8] sm:$0xff]
    %v139 = vld [vmem:[#allocation5 + $0x300] sm:$0xff]
    %v140 = vld [vmem:[#allocation5 + $0x308] sm:$0xff]
    %v141 = vld [vmem:[#allocation5 + $0x310] sm:$0xff]
    %v142 = vld [vmem:[#allocation5 + $0x318] sm:$0xff]
    %v143 = vld [vmem:[#allocation5 + $0x320] sm:$0xff]
    %v144 = vld [vmem:[#allocation5 + $0x328] sm:$0xff]
    %v145 = vld [vmem:[#allocation5 + $0x330] sm:$0xff]
    %v146 = vld [vmem:[#allocation5 + $0x338] sm:$0xff]
    %v147 = vld [vmem:[#allocation5 + $0x340] sm:$0xff]
    %v148 = vld [vmem:[#allocation5 + $0x348] sm:$0xff]
    %v149 = vld [vmem:[#allocation5 + $0x350] sm:$0xff]
    %v150 = vld [vmem:[#allocation5 + $0x358] sm:$0xff]
    %v151 = vld [vmem:[#allocation5 + $0x360] sm:$0xff]
    %v152 = vld [vmem:[#allocation5 + $0x368] sm:$0xff]
    %v153 = vld [vmem:[#allocation5 + $0x370] sm:$0xff]
    %v154 = vld [vmem:[#allocation5 + $0x378] sm:$0xff]
    %v155 = vld [vmem:[#allocation5 + $0x380] sm:$0xff]
    %v156 = vld [vmem:[#allocation5 + $0x388] sm:$0xff]
    %v157 = vld [vmem:[#allocation5 + $0x390] sm:$0xff]
    %v158 = vld [vmem:[#allocation5 + $0x398] sm:$0xff]
    %v159 = vld [vmem:[#allocation5 + $0x3a0] sm:$0xff]
    %v160 = vld [vmem:[#allocation5 + $0x3a8] sm:$0xff]
    %v161 = vld [vmem:[#allocation5 + $0x3b0] sm:$0xff]
    %v162 = vld [vmem:[#allocation5 + $0x3b8] sm:$0xff]
    %v163 = vld [vmem:[#allocation5 + $0x3c0] sm:$0xff]
    %v164 = vld [vmem:[#allocation5 + $0x3c8] sm:$0xff]
    %v165 = vld [vmem:[#allocation5 + $0x3d0] sm:$0xff]
    %v166 = vld [vmem:[#allocation5 + $0x3d8] sm:$0xff]
    %v167 = vld [vmem:[#allocation5 + $0x3e0] sm:$0xff]
    %v168 = vld [vmem:[#allocation5 + $0x3e8] sm:$0xff]
    %v169 = vld [vmem:[#allocation5 + $0x3f0] sm:$0xff]
    %v170 = vld [vmem:[#allocation5 + $0x3f8] sm:$0xff]
    %v171 = vld [vmem:[%s2] sm:$0xf]
    %v173 = vlaneseq
    %v174 = vshrl.u32 %v173, 7
    %v175 = vsub.s32 0, %v174
    %v176 = vrot.slane %v171, %v175
    %v177 = vlaneseq
    %v178 = vshrl.u32 %v177, 7
    %v179 = vsub.s32 1, %v178
    %v180 = vrot.slane %v171, %v179
    %v181 = vlaneseq
    %v182 = vshrl.u32 %v181, 7
    %v183 = vsub.s32 2, %v182
    %v184 = vrot.slane %v171, %v183
    %v185 = vlaneseq
    %v186 = vshrl.u32 %v185, 7
    %v187 = vsub.s32 3, %v186
    %v188 = vrot.slane %v171, %v187
    %193 = vmatprep.subr.mxu0 %v44
    %194 = vmatpush1.xpose.msra.mxu0 %v43
    %195 = vmatprep.subr.mxu0 %v46
    %196 = vmatpush1.xpose.msra.mxu0 %v45
    %197 = vmatprep.subr.mxu0 %v48
    %198 = vmatpush1.xpose.msra.mxu0 %v47
    %199 = vmatprep.subr.mxu0 %v50
    %200 = vmatpush1.xpose.msra.mxu0 %v49
    %201 = vmatprep.subr.mxu0 %v52
    %202 = vmatpush1.xpose.msra.mxu0 %v51
    %203 = vmatprep.subr.mxu0 %v54
    %204 = vmatpush1.xpose.msra.mxu0 %v53
    %205 = vmatprep.subr.mxu0 %v56
    %206 = vmatpush1.xpose.msra.mxu0 %v55
    %207 = vmatprep.subr.mxu0 %v58
    %208 = vmatpush1.xpose.msra.mxu0 %v57
    %209 = vmatprep.subr.mxu0 %v60
    %210 = vmatpush1.xpose.msra.mxu0 %v59
    %211 = vmatprep.subr.mxu0 %v62
    %212 = vmatpush1.xpose.msra.mxu0 %v61
    %213 = vmatprep.subr.mxu0 %v64
    %214 = vmatpush1.xpose.msra.mxu0 %v63
    %215 = vmatprep.subr.mxu0 %v66
    %216 = vmatpush1.xpose.msra.mxu0 %v65
    %217 = vmatprep.subr.mxu0 %v68
    %218 = vmatpush1.xpose.msra.mxu0 %v67
    %219 = vmatprep.subr.mxu0 %v70
    %220 = vmatpush1.xpose.msra.mxu0 %v69
    %221 = vmatprep.subr.mxu0 %v72
    %222 = vmatpush1.xpose.msra.mxu0 %v71
    %223 = vmatprep.subr.mxu0 %v74
    %224 = vmatpush1.xpose.msra.mxu0 %v73
    %225 = vmatprep.subr.mxu0 %v76
    %226 = vmatpush1.xpose.msra.mxu0 %v75
    %227 = vmatprep.subr.mxu0 %v78
    %228 = vmatpush1.xpose.msra.mxu0 %v77
    %229 = vmatprep.subr.mxu0 %v80
    %230 = vmatpush1.xpose.msra.mxu0 %v79
    %231 = vmatprep.subr.mxu0 %v82
    %232 = vmatpush1.xpose.msra.mxu0 %v81
    %233 = vmatprep.subr.mxu0 %v84
    %234 = vmatpush1.xpose.msra.mxu0 %v83
    %235 = vmatprep.subr.mxu0 %v86
    %236 = vmatpush1.xpose.msra.mxu0 %v85
    %237 = vmatprep.subr.mxu0 %v88
    %238 = vmatpush1.xpose.msra.mxu0 %v87
    %239 = vmatprep.subr.mxu0 %v90
    %240 = vmatpush1.xpose.msra.mxu0 %v89
    %241 = vmatprep.subr.mxu0 %v92
    %242 = vmatpush1.xpose.msra.mxu0 %v91
    %243 = vmatprep.subr.mxu0 %v94
    %244 = vmatpush1.xpose.msra.mxu0 %v93
    %245 = vmatprep.subr.mxu0 %v96
    %246 = vmatpush1.xpose.msra.mxu0 %v95
    %247 = vmatprep.subr.mxu0 %v98
    %248 = vmatpush1.xpose.msra.mxu0 %v97
    %249 = vmatprep.subr.mxu0 %v100
    %250 = vmatpush1.xpose.msra.mxu0 %v99
    %251 = vmatprep.subr.mxu0 %v102
    %252 = vmatpush1.xpose.msra.mxu0 %v101
    %253 = vmatprep.subr.mxu0 %v104
    %254 = vmatpush1.xpose.msra.mxu0 %v103
    %255 = vmatprep.subr.mxu0 %v106
    %256 = vmatpush1.xpose.msra.mxu0 %v105
    %257 = vmatprep.mubr.f32.mxu0 %v42
    %258 = vmatmul.mubr.f32.gmra.mrb[0].mxu0 %v41
    %v259 = vpop.f32.mrb[0].mxu0
    %v260 = vadd.f32 %v176, %v259
    %v261 = vpop.f32.mrb[0].mxu0
    %v262 = vadd.f32 %v180, %v261
    %263 = vdwg.mxu0
    %264 = vmatprep.subr.mxu0 %v108
    %265 = vmatpush1.xpose.msra.mxu0 %v107
    %266 = vmatprep.subr.mxu0 %v110
    %267 = vmatpush1.xpose.msra.mxu0 %v109
    %268 = vmatprep.subr.mxu0 %v112
    %269 = vmatpush1.xpose.msra.mxu0 %v111
    %270 = vmatprep.subr.mxu0 %v114
    %271 = vmatpush1.xpose.msra.mxu0 %v113
    %272 = vmatprep.subr.mxu0 %v116
    %273 = vmatpush1.xpose.msra.mxu0 %v115
    %274 = vmatprep.subr.mxu0 %v118
    %275 = vmatpush1.xpose.msra.mxu0 %v117
    %276 = vmatprep.subr.mxu0 %v120
    %277 = vmatpush1.xpose.msra.mxu0 %v119
    %278 = vmatprep.subr.mxu0 %v122
    %279 = vmatpush1.xpose.msra.mxu0 %v121
    %280 = vmatprep.subr.mxu0 %v124
    %281 = vmatpush1.xpose.msra.mxu0 %v123
    %282 = vmatprep.subr.mxu0 %v126
    %283 = vmatpush1.xpose.msra.mxu0 %v125
    %284 = vmatprep.subr.mxu0 %v128
    %285 = vmatpush1.xpose.msra.mxu0 %v127
    %286 = vmatprep.subr.mxu0 %v130
    %287 = vmatpush1.xpose.msra.mxu0 %v129
    %288 = vmatprep.subr.mxu0 %v132
    %289 = vmatpush1.xpose.msra.mxu0 %v131
    %290 = vmatprep.subr.mxu0 %v134
    %291 = vmatpush1.xpose.msra.mxu0 %v133
    %292 = vmatprep.subr.mxu0 %v136
    %293 = vmatpush1.xpose.msra.mxu0 %v135
    %294 = vmatprep.subr.mxu0 %v138
    %295 = vmatpush1.xpose.msra.mxu0 %v137
    %296 = vmatprep.subr.mxu0 %v140
    %297 = vmatpush1.xpose.msra.mxu0 %v139
    %298 = vmatprep.subr.mxu0 %v142
    %299 = vmatpush1.xpose.msra.mxu0 %v141
    %300 = vmatprep.subr.mxu0 %v144
    %301 = vmatpush1.xpose.msra.mxu0 %v143
    %302 = vmatprep.subr.mxu0 %v146
    %303 = vmatpush1.xpose.msra.mxu0 %v145
    %304 = vmatprep.subr.mxu0 %v148
    %305 = vmatpush1.xpose.msra.mxu0 %v147
    %306 = vmatprep.subr.mxu0 %v150
    %307 = vmatpush1.xpose.msra.mxu0 %v149
    %308 = vmatprep.subr.mxu0 %v152
    %309 = vmatpush1.xpose.msra.mxu0 %v151
    %310 = vmatprep.subr.mxu0 %v154
    %311 = vmatpush1.xpose.msra.mxu0 %v153
    %312 = vmatprep.subr.mxu0 %v156
    %313 = vmatpush1.xpose.msra.mxu0 %v155
    %314 = vmatprep.subr.mxu0 %v158
    %315 = vmatpush1.xpose.msra.mxu0 %v157
    %316 = vmatprep.subr.mxu0 %v160
    %317 = vmatpush1.xpose.msra.mxu0 %v159
    %318 = vmatprep.subr.mxu0 %v162
    %319 = vmatpush1.xpose.msra.mxu0 %v161
    %320 = vmatprep.subr.mxu0 %v164
    %321 = vmatpush1.xpose.msra.mxu0 %v163
    %322 = vmatprep.subr.mxu0 %v166
    %323 = vmatpush1.xpose.msra.mxu0 %v165
    %324 = vmatprep.subr.mxu0 %v168
    %325 = vmatpush1.xpose.msra.mxu0 %v167
    %326 = vmatprep.subr.mxu0 %v170
    %327 = vmatpush1.xpose.msra.mxu0 %v169
    %328 = vmatprep.mubr.f32.mxu0 %v42
    %329 = vmatmul.mubr.f32.gmra.mrb[0].mxu0 %v41
    %v330 = vpop.f32.mrb[0].mxu0
    %v331 = vadd.f32 %v184, %v330
    %v332 = vpop.f32.mrb[0].mxu0
    %v333 = vadd.f32 %v188, %v332
    %334 = vdwg.mxu0
    %335 = vst [vmem:[#allocation7] sm:$0xff] %v260
    %336 = vst [vmem:[#allocation7 + $0x8] sm:$0xff] %v262
    %337 = vst [vmem:[#allocation7 + $0x10] sm:$0xff] %v331
    %338 = vst [vmem:[#allocation7 + $0x18] sm:$0xff] %v333
    // Predicated region
    $region22: #{tpu_custom_call.1} parent=1 // pred_check
      _
    $region23: #{tpu_custom_call.1} parent=1 // pred_check_branch
      %340 = sbr.rel (0) target = $region25
    $region24: #{tpu_custom_call.1} parent=1 // pred_region
      %s342 = ssub.s32 512, 512
      %343 = vsyncadd [#allocation4], %s342
      %s345 = sshll.u32 [#allocation7], 4
      %s346 = int_to_ptr.vmem [resolvable:$true] %s345
      %348 = dma.vmem_to_hbm [thread:$0]  %s346, 512, %s3, [#allocation4]
    $region25: #{tpu_custom_call.1} parent=1 // pred_fallthru
      _
    // Predicated region
    $region26: #{tpu_custom_call.1} parent=1 // pred_check
      _
    $region27: #{tpu_custom_call.1} parent=1 // pred_check_branch
      %350 = sbr.rel (0) target = $region29
    $region28: #{tpu_custom_call.1} parent=1 // pred_region
      %351 = dma.done [#allocation4], 512
    $region29: #{tpu_custom_call.1} parent=1 // pred_fallthru
      _
    %352 = vsyncpa [#allocation3], 1
    %353 = vsyncpa [#allocation6], 1
    %354 = vsyncpa [#allocation4], 1

</llo_original>
